<compile_context>
chip_gen: v5e
topology: v5e:2x2
jax: 0.10.0
libtpu: 0.0.40
codegen_flags: <defaults>
</compile_context>

<pallas_src>
import functools

import jax
import jax.numpy as jnp
from jax.experimental import pallas as pl
from jax.experimental.pallas import tpu as pltpu


# ----------------------------- configuration -------------------------------
CONFIG = {
    "dim_t": 16,                 # input time-series length
    "dim_z_phy": 4,
    "dim_z_aux": 4,
    "activation": "relu",
    "hidlayers_feat": [32],          # FeatureExtractor: Linear(16,32)+act
    "hidlayers_unmixer": [32, 32],   # unmixer MLP dims = [32, 32, 16]
    "hidlayers_phy": [32],           # phy heads   MLP dims = [16, 32, 4]
    "hidlayers_aux_enc": [32],       # aux heads   MLP dims = [16, 32, 4]
}
BATCH = 8
LANES = 128
BIAS_ROWS = 8


def _round_up(v, m):
    return -(-v // m) * m


_ACTIVATIONS = {
    "relu": lambda v: jnp.maximum(v, 0.0),
    "leakyrelu": lambda v: jnp.where(v >= 0, v, 0.01 * v),
    "elu": lambda v: jnp.where(v >= 0, v, jnp.expm1(v)),
    "tanh": jnp.tanh,
    "softplus": jax.nn.softplus,
}


# ------------------------------- kernel ------------------------------------
def _make_encoders_kernel(dt_pad, activation):
    """Build the fused kernel; all row offsets into the slab are static."""
    act = _ACTIVATIONS[activation]
    r1 = dt_pad                 # end of feature-extractor weight rows
    r2 = r1 + LANES             # end of unmixer layer-0 rows
    r3 = r2 + LANES             # end of unmixer layer-1 rows
    r4 = r3 + LANES             # end of packed head layer-0 rows
    r5 = r4 + LANES             # end of block-diagonal head layer-1 rows
    # rows r5 : r5+BIAS_ROWS hold the 5 bias vectors (rest zero).

    def kernel(x_ref, w_ref, out_ref):
        mm = lambda a, w: jnp.dot(a, w, preferred_element_type=jnp.float32)
        x = x_ref[...].astype(jnp.float32)              # (TM, dt_pad)
        b = w_ref[r5:r5 + BIAS_ROWS, :]                 # (8, 128) bias rows

        # FeatureExtractor: Linear(dim_t, 32)+act, lane-padded to 128.
        feats = act(mm(x, w_ref[0:r1, :]) + b[0:1, :])
        # unmixer layer 0: Linear(32, 32)+act (lane-padded).
        h_u = act(mm(feats, w_ref[r1:r2, :]) + b[1:2, :])
        # unmixer layer 1: Linear(32, dim_t), placed at output lanes
        # [2*dzp+2*dza : 2*dzp+2*dza+dim_t]; all other lanes exactly zero.
        unmixed = mm(h_u, w_ref[r2:r3, :]) + b[2:3, :]
        # Four head first layers fused into one (128,128) matmul + one act.
        h_heads = act(mm(unmixed, w_ref[r3:r4, :]) + b[3:4, :])
        # Block-diagonal head second layers (outputs at lanes 0:2*dzp+2*dza)
        # plus the already lane-positioned `unmixed` -> one lane-dense output.
        out = mm(h_heads, w_ref[r4:r5, :]) + b[4:5, :] + unmixed
        out_ref[...] = out.astype(out_ref.dtype)

    return kernel


# ------------------------------ parameters ----------------------------------
def _init_linear(key, fan_in, fan_out):
    """PyTorch-style uniform(-1/sqrt(fan_in), 1/sqrt(fan_in)) init."""
    kw, kb = jax.random.split(key)
    bound = 1.0 / jnp.sqrt(jnp.float32(fan_in))
    # Stored as (in, out) so y = x @ W + b  (== x @ W_torch.T + b).
    w = jax.random.uniform(kw, (fan_in, fan_out), jnp.float32, -bound, bound)
    b = jax.random.uniform(kb, (1, fan_out), jnp.float32, -bound, bound)
    return w, b


def init_params(config, key):
    dim_t = config["dim_t"]
    dza = config["dim_z_aux"]
    assert len(config["hidlayers_feat"]) == 1
    assert len(config["hidlayers_unmixer"]) == 2
    assert len(config["hidlayers_phy"]) == 1
    assert len(config["hidlayers_aux_enc"]) == 1

    n_lin = 7 if dza <= 0 else 11
    keys = jax.random.split(key, n_lin)
    params = []
    # FeatureExtractor
    params += list(_init_linear(keys[0], dim_t, config["hidlayers_feat"][0]))
    # unmixer MLP: hidlayers_unmixer + [dim_t]
    u_dims = config["hidlayers_unmixer"] + [dim_t]
    params += list(_init_linear(keys[1], u_dims[0], u_dims[1]))
    params += list(_init_linear(keys[2], u_dims[1], u_dims[2]))
    # phy mean / lnvar heads
    p_dims = [dim_t] + config["hidlayers_phy"] + [config["dim_z_phy"]]
    params += list(_init_linear(keys[3], p_dims[0], p_dims[1]))
    params += list(_init_linear(keys[4], p_dims[1], p_dims[2]))
    params += list(_init_linear(keys[5], p_dims[0], p_dims[1]))
    params += list(_init_linear(keys[6], p_dims[1], p_dims[2]))
    if dza > 0:
        a_dims = [dim_t] + config["hidlayers_aux_enc"] + [dza]
        params += list(_init_linear(keys[7], a_dims[0], a_dims[1]))
        params += list(_init_linear(keys[8], a_dims[1], a_dims[2]))
        params += list(_init_linear(keys[9], a_dims[0], a_dims[1]))
        params += list(_init_linear(keys[10], a_dims[1], a_dims[2]))
    return tuple(params)


def pack_params(params, config):
    """Pack all Linear weights + biases into one lane-padded f32 slab."""
    dim_t = config["dim_t"]
    dzp = config["dim_z_phy"]
    dza = config["dim_z_aux"]
    dt_pad = _round_up(dim_t, 8)
    u_off = 2 * dzp + 2 * dza            # lane offset of `unmixed` in the output

    wf, bf, wu0, bu0, wu1, bu1, *head_params = params
    heads = [head_params[4 * i:4 * i + 4] for i in range(len(head_params) // 4)]
    out_dims = [dzp, dzp] + ([dza, dza] if dza > 0 else [])

    assert wf.shape[1] <= LANES and wu0.shape[1] <= LANES
    assert u_off + dim_t <= LANES

    def place_w(rows, w, r0, c0):
        return jnp.zeros((rows, LANES), jnp.float32).at[
            r0:r0 + w.shape[0], c0:c0 + w.shape[1]].set(w)

    def place_b(b, c0):
        return jnp.zeros((1, LANES), jnp.float32).at[
            :, c0:c0 + b.shape[-1]].set(b.reshape(1, -1))

    w_feat = place_w(dt_pad, wf, 0, 0)                 # (dt_pad, 128)
    w_unmix0 = place_w(LANES, wu0, 0, 0)               # (128, 128)
    w_unmix1 = place_w(LANES, wu1, 0, u_off)           # (128, 128) cols u_off:u_off+dim_t

    w_head0 = jnp.zeros((LANES, LANES), jnp.float32)   # heads' first layers, lane-concat
    b_head0 = jnp.zeros((1, LANES), jnp.float32)
    w_head1 = jnp.zeros((LANES, LANES), jnp.float32)   # heads' second layers, block-diag
    b_head1 = jnp.zeros((1, LANES), jnp.float32)
    hcol = ocol = 0
    for (w0, b0, w1, b1), od in zip(heads, out_dims):
        hh = w0.shape[1]
        w_head0 = w_head0.at[u_off:u_off + dim_t, hcol:hcol + hh].set(w0)
        b_head0 = b_head0.at[:, hcol:hcol + hh].set(b0.reshape(1, -1))
        w_head1 = w_head1.at[hcol:hcol + hh, ocol:ocol + od].set(w1)
        b_head1 = b_head1.at[:, ocol:ocol + od].set(b1.reshape(1, -1))
        hcol += hh
        ocol += od
    assert hcol <= LANES

    bias_rows = jnp.concatenate(
        [place_b(bf, 0), place_b(bu0, 0), place_b(bu1, u_off),
         b_head0, b_head1,
         jnp.zeros((BIAS_ROWS - 5, LANES), jnp.float32)], axis=0)   # (8, 128)

    slab = jnp.concatenate(
        [w_feat, w_unmix0, w_unmix1, w_head0, w_head1, bias_rows], axis=0)
    return slab


# ------------------------------- wrapper -------------------------------------
@functools.partial(
    jax.jit, static_argnames=("dim_t", "dim_z_phy", "dim_z_aux", "activation"))
def encoders_forward(x, slab, *, dim_t, dim_z_phy, dim_z_aux,
                     activation="relu"):
    n = x.shape[0]
    dt_pad = _round_up(dim_t, 8)
    n8 = _round_up(max(n, 1), 8)
    tm = min(n8, 512)                     # rows per grid step
    n_pad = _round_up(n8, tm)

    if (n_pad, dt_pad) != (n, x.shape[1]):
        x = jnp.pad(x, ((0, n_pad - n), (0, dt_pad - x.shape[1])))

    grid = (n_pad // tm,)
    slab_rows = dt_pad + 4 * LANES + BIAS_ROWS

    flops = 2 * n_pad * (dt_pad * LANES + 4 * LANES * LANES)
    bytes_accessed = 4 * (n_pad * dt_pad + slab_rows * LANES + n_pad * LANES)

    out = pl.pallas_call(
        _make_encoders_kernel(dt_pad, activation),
        out_shape=jax.ShapeDtypeStruct((n_pad, LANES), jnp.float32),
        grid_spec=pltpu.PrefetchScalarGridSpec(
            num_scalar_prefetch=0,
            grid=grid,
            in_specs=[
                pl.BlockSpec((tm, dt_pad), lambda i: (i, 0)),        # x rows
                pl.BlockSpec((slab_rows, LANES), lambda i: (0, 0)),  # slab (resident)
            ],
            out_specs=pl.BlockSpec((tm, LANES), lambda i: (i, 0)),
        ),
        compiler_params=pltpu.CompilerParams(
            dimension_semantics=("parallel",)),
        cost_estimate=pl.CostEstimate(
            flops=flops, transcendentals=0, bytes_accessed=bytes_accessed),
    )(x, slab)

    dzp, dza = dim_z_phy, dim_z_aux
    zpm = out[:n, 0:dzp]
    zpl = out[:n, dzp:2 * dzp]
    if dza > 0:
        zam = out[:n, 2 * dzp:2 * dzp + dza]
        zal = out[:n, 2 * dzp + dza:2 * dzp + 2 * dza]
    else:
        zam = jnp.zeros((n, 0), jnp.float32)
        zal = jnp.zeros((n, 0), jnp.float32)
    u_off = 2 * dzp + 2 * dza
    unmixed = out[:n, u_off:u_off + dim_t]
    return zpm, zpl, zam, zal, unmixed


# --------------------------- pure-JAX reference ------------------------------
def reference_forward(x, params, config):
    act = _ACTIVATIONS[config["activation"]]
    lin = lambda h, w, b: h @ w + b
    wf, bf, wu0, bu0, wu1, bu1, *head_params = params
    heads = [head_params[4 * i:4 * i + 4] for i in range(len(head_params) // 4)]

    features = act(lin(x, wf, bf))
    h = act(lin(features, wu0, bu0))
    unmixed = lin(h, wu1, bu1)

    def head(w0, b0, w1, b1):
        return lin(act(lin(unmixed, w0, b0)), w1, b1)

    n = x.shape[0]
    zpm = head(*heads[0])
    zpl = head(*heads[1])
    if config["dim_z_aux"] > 0:
        zam = head(*heads[2])
        zal = head(*heads[3])
    else:
        zam = jnp.zeros((n, 0), jnp.float32)
        zal = jnp.zeros((n, 0), jnp.float32)
    return zpm, zpl, zam, zal, unmixed


# --------------------------------- main ---------------------------------------
if __name__ == "__main__":
    key = jax.random.PRNGKey(0)
    k_x, k_p = jax.random.split(key)

    x = jax.random.normal(k_x, (BATCH, CONFIG["dim_t"]), jnp.float32)
    params = init_params(CONFIG, k_p)
    slab = jax.block_until_ready(pack_params(params, CONFIG))

    outs = encoders_forward(
        x, slab,
        dim_t=CONFIG["dim_t"],
        dim_z_phy=CONFIG["dim_z_phy"],
        dim_z_aux=CONFIG["dim_z_aux"],
        activation=CONFIG["activation"],
    )
    outs = jax.block_until_ready(outs)

    refs = reference_forward(x, params, CONFIG)
    for got, want in zip(outs, refs):
        assert got.shape == want.shape, (got.shape, want.shape)
        assert jnp.allclose(got, want, atol=1e-5, rtol=1e-4), "mismatch vs reference"

    print("KERNEL_OK")
</pallas_src>

<mosaic_0001>
module attributes {stable_mosaic.version = 11 : i64} {
  func.func @kernel(%arg0: i32, %arg1: memref<8x16xf32, #tpu.memory_space<vmem>>, %arg2: memref<536x128xf32, #tpu.memory_space<vmem>>, %arg3: memref<8x128xf32, #tpu.memory_space<vmem>>) attributes {dimension_semantics = [#tpu.dimension_semantics<parallel>], iteration_bounds = array<i64: 1>, scalar_prefetch = 0 : i64, scratch_operands = 0 : i64, tpu.core_type = #tpu.core_type<tc>, window_params = [{transform_indices = @transform_0, window_bounds = array<i64: 8, 16>}, {pipeline_mode = #tpu.pipeline_mode<synchronous>, transform_indices = @transform_1, window_bounds = array<i64: 536, 128>}, {transform_indices = @transform_2, window_bounds = array<i64: 8, 128>}]} {
    %c0 = arith.constant 0 : index
    %c0_0 = arith.constant 0 : index
    %0 = vector.load %arg1[%c0, %c0_0] : memref<8x16xf32, #tpu.memory_space<vmem>>, vector<8x16xf32>
    %c528 = arith.constant 528 : index
    %c0_1 = arith.constant 0 : index
    %1 = vector.load %arg2[%c528, %c0_1] : memref<536x128xf32, #tpu.memory_space<vmem>>, vector<8x128xf32>
    %c0_2 = arith.constant 0 : index
    %c0_3 = arith.constant 0 : index
    %2 = vector.load %arg2[%c0_2, %c0_3] : memref<536x128xf32, #tpu.memory_space<vmem>>, vector<16x128xf32>
    %cst = arith.constant dense<0.000000e+00> : vector<8x128xf32>
    %3 = tpu.matmul %0, %2, %cst {dimension_numbers = #tpu.dot_dimension_numbers<[1], [0], [0], [1], [0, 0, 1, 1], [], []>} : vector<8x16xf32>, vector<16x128xf32>, vector<8x128xf32> -> vector<8x128xf32>
    %4 = vector.extract_strided_slice %1 {offsets = [0, 0], sizes = [1, 128], strides = [1, 1]} : vector<8x128xf32> to vector<1x128xf32>
    %5 = vector.broadcast %4 : vector<1x128xf32> to vector<8x128xf32>
    %6 = arith.addf %3, %5 : vector<8x128xf32>
    %cst_4 = arith.constant 0.000000e+00 : f32
    %7 = vector.broadcast %cst_4 : f32 to vector<8x128xf32>
    %8 = arith.maximumf %6, %7 : vector<8x128xf32>
    %c16 = arith.constant 16 : index
    %c0_5 = arith.constant 0 : index
    %9 = vector.load %arg2[%c16, %c0_5] : memref<536x128xf32, #tpu.memory_space<vmem>>, vector<128x128xf32>
    %cst_6 = arith.constant dense<0.000000e+00> : vector<8x128xf32>
    %10 = tpu.matmul %8, %9, %cst_6 {dimension_numbers = #tpu.dot_dimension_numbers<[1], [0], [0], [1], [0, 0, 1, 1], [], []>} : vector<8x128xf32>, vector<128x128xf32>, vector<8x128xf32> -> vector<8x128xf32>
    %11 = vector.extract_strided_slice %1 {offsets = [1, 0], sizes = [1, 128], strides = [1, 1]} : vector<8x128xf32> to vector<1x128xf32>
    %12 = vector.broadcast %11 : vector<1x128xf32> to vector<8x128xf32>
    %13 = arith.addf %10, %12 : vector<8x128xf32>
    %cst_7 = arith.constant 0.000000e+00 : f32
    %14 = vector.broadcast %cst_7 : f32 to vector<8x128xf32>
    %15 = arith.maximumf %13, %14 : vector<8x128xf32>
    %c144 = arith.constant 144 : index
    %c0_8 = arith.constant 0 : index
    %16 = vector.load %arg2[%c144, %c0_8] : memref<536x128xf32, #tpu.memory_space<vmem>>, vector<128x128xf32>
    %cst_9 = arith.constant dense<0.000000e+00> : vector<8x128xf32>
    %17 = tpu.matmul %15, %16, %cst_9 {dimension_numbers = #tpu.dot_dimension_numbers<[1], [0], [0], [1], [0, 0, 1, 1], [], []>} : vector<8x128xf32>, vector<128x128xf32>, vector<8x128xf32> -> vector<8x128xf32>
    %18 = vector.extract_strided_slice %1 {offsets = [2, 0], sizes = [1, 128], strides = [1, 1]} : vector<8x128xf32> to vector<1x128xf32>
    %19 = vector.broadcast %18 : vector<1x128xf32> to vector<8x128xf32>
    %20 = arith.addf %17, %19 : vector<8x128xf32>
    %c272 = arith.constant 272 : index
    %c0_10 = arith.constant 0 : index
    %21 = vector.load %arg2[%c272, %c0_10] : memref<536x128xf32, #tpu.memory_space<vmem>>, vector<128x128xf32>
    %cst_11 = arith.constant dense<0.000000e+00> : vector<8x128xf32>
    %22 = tpu.matmul %20, %21, %cst_11 {dimension_numbers = #tpu.dot_dimension_numbers<[1], [0], [0], [1], [0, 0, 1, 1], [], []>} : vector<8x128xf32>, vector<128x128xf32>, vector<8x128xf32> -> vector<8x128xf32>
    %23 = vector.extract_strided_slice %1 {offsets = [3, 0], sizes = [1, 128], strides = [1, 1]} : vector<8x128xf32> to vector<1x128xf32>
    %24 = vector.broadcast %23 : vector<1x128xf32> to vector<8x128xf32>
    %25 = arith.addf %22, %24 : vector<8x128xf32>
    %cst_12 = arith.constant 0.000000e+00 : f32
    %26 = vector.broadcast %cst_12 : f32 to vector<8x128xf32>
    %27 = arith.maximumf %25, %26 : vector<8x128xf32>
    %c400 = arith.constant 400 : index
    %c0_13 = arith.constant 0 : index
    %28 = vector.load %arg2[%c400, %c0_13] : memref<536x128xf32, #tpu.memory_space<vmem>>, vector<128x128xf32>
    %cst_14 = arith.constant dense<0.000000e+00> : vector<8x128xf32>
    %29 = tpu.matmul %27, %28, %cst_14 {dimension_numbers = #tpu.dot_dimension_numbers<[1], [0], [0], [1], [0, 0, 1, 1], [], []>} : vector<8x128xf32>, vector<128x128xf32>, vector<8x128xf32> -> vector<8x128xf32>
    %30 = vector.extract_strided_slice %1 {offsets = [4, 0], sizes = [1, 128], strides = [1, 1]} : vector<8x128xf32> to vector<1x128xf32>
    %31 = vector.broadcast %30 : vector<1x128xf32> to vector<8x128xf32>
    %32 = arith.addf %29, %31 : vector<8x128xf32>
    %33 = arith.addf %32, %20 : vector<8x128xf32>
    %c0_15 = arith.constant 0 : index
    %c0_16 = arith.constant 0 : index
    %34 = vector.load %arg3[%c0_15, %c0_16] : memref<8x128xf32, #tpu.memory_space<vmem>>, vector<8x128xf32>
    tpu.vector_store %arg3[%c0_15, %c0_16], %33 {strides = array<i32>} : memref<8x128xf32, #tpu.memory_space<vmem>>, vector<8x128xf32>,
    return
  }
  func.func @transform_0(%arg0: i32) -> (i32, i32) {
    %c0_i32 = arith.constant 0 : i32
    %c0_i32_0 = arith.constant 0 : i32
    return %arg0, %c0_i32 : i32, i32
  }
  func.func @transform_1(%arg0: i32) -> (i32, i32) {
    %c0_i32 = arith.constant 0 : i32
    %c0_i32_0 = arith.constant 0 : i32
    %c0_i32_1 = arith.constant 0 : i32
    return %c0_i32, %c0_i32_0 : i32, i32
  }
  func.func @transform_2(%arg0: i32) -> (i32, i32) {
    %c0_i32 = arith.constant 0 : i32
    %c0_i32_0 = arith.constant 0 : i32
    return %arg0, %c0_i32 : i32, i32
  }
}

</mosaic_0001>

<llo_original>
// kernel: encoders_forward.1
$region0: #{encoders_forward.1}
  #allocation0 [shape = 'u32[]', space=smem, size = 0x4, offset = 0x4, fixed_abs, tag = 'smem constant byte address 0x4 - core index']
  #allocation1 [shape = 'u32[72,128]{1,0:T(1,128)}', space=vmem, size = 0x9000, scoped, tag = 'internal scratch']
  %s0 = inlined_call_operand.hbm [shape: f32[8,16], index: 0, kind: input, shape index: {}]
  %s1 = inlined_call_operand.hbm [shape: f32[536,128], index: 1, kind: input, shape index: {}]
  %s2 = inlined_call_operand.vmem [shape: f32[8,128], index: 2, kind: output, shape index: {}]
  %s3 = sld [smem:[#allocation0]]
  $region26: #{encoders_forward.1} parent=0
    _
  %s5 = ssub.s32 1, %s3
  %s6 = scalar_select 0, %s5, %s3
  $region1: #{encoders_forward.1} parent=0
    #allocation2 [shape = 'u8[4096]{0}', space=vmem, size = 0x1000, scoped, tag = 'input window, operand 0, single buffered']
    #allocation3 [shape = 's32[1]{0}', space=sflag, size = 0x4, scoped, tag = 'scoped memory for encoders_forward.1']
    #allocation4 [shape = 'u8[274432]{0}', space=vmem, size = 0x43000, scoped, tag = 'input window, operand 1, single buffered']
    #allocation5 [shape = 's32[1]{0}', space=sflag, size = 0x4, scoped, tag = 'scoped memory for encoders_forward.1']
    %7 = vsyncpa [#allocation3], 0
    %8 = vsyncpa [#allocation5], 0
    // Predicated region
    $region2: #{encoders_forward.1} parent=1 // pred_check
      _
    $region3: #{encoders_forward.1} parent=1 // pred_check_branch
      %10 = sbr.rel (0) target = $region5
    $region4: #{encoders_forward.1} parent=1 // pred_region
      %12 = vsyncadd [#allocation3], 0
      %s14 = sshll.u32 %s0, 4
      %s15 = int_to_ptr.hbm [resolvable:$true] %s14
      %s16 = sshll.u32 [#allocation2], 4
      %s17 = int_to_ptr.vmem [resolvable:$true] %s16
      %19 = dma.hbm_to_vmem [thread:$0]  %s15, 128, %s17, [#allocation3]
    $region5: #{encoders_forward.1} parent=1 // pred_fallthru
      _
    // Predicated region
    $region6: #{encoders_forward.1} parent=1 // pred_check
      _
    $region7: #{encoders_forward.1} parent=1 // pred_check_branch
      %21 = sbr.rel (0) target = $region9
    $region8: #{encoders_forward.1} parent=1 // pred_region
      %23 = vsyncadd [#allocation5], 0
      %s24 = sshll.u32 %s1, 4
      %s25 = int_to_ptr.hbm [resolvable:$true] %s24
      %s26 = sshll.u32 [#allocation4], 4
      %s27 = int_to_ptr.vmem [resolvable:$true] %s26
      %32 = dma.hbm_to_vmem [thread:$0]  %s25, 8576, %s27, [#allocation5], 128, 128, 8
    $region9: #{encoders_forward.1} parent=1 // pred_fallthru
      _
    // Predicated region
    $region10: #{encoders_forward.1} parent=1 // pred_check
      _
    $region11: #{encoders_forward.1} parent=1 // pred_check_branch
      %34 = sbr.rel (0) target = $region13
    $region12: #{encoders_forward.1} parent=1 // pred_region
      %36 = dma.done [#allocation3], 128
    $region13: #{encoders_forward.1} parent=1 // pred_fallthru
      _
    // Predicated region
    $region14: #{encoders_forward.1} parent=1 // pred_check
      _
    $region15: #{encoders_forward.1} parent=1 // pred_check_branch
      %38 = sbr.rel (0) target = $region17
    $region16: #{encoders_forward.1} parent=1 // pred_region
      %40 = dma.done [#allocation5], 8576
    $region17: #{encoders_forward.1} parent=1 // pred_fallthru
      _
    %v41 = vld [vmem:[#allocation2] sm:$0xff]
    %v42 = vld [vmem:[#allocation4 + $0x210] sm:$0xff]
    %v43 = vld [vmem:[#allocation4] sm:$0xff]
    %v44 = vld [vmem:[#allocation4 + $0x8] sm:$0xff]
    %v45 = vperm.slane %v42, 0
    %vm46 = vcmask 130048
    %v48 = vsel %vm46, %v41, 0
    %50 = vmatpush.msra.mxu0 0.0
    %51 = vmatpush.msra.mxu0 0.0
    %52 = vmatpush.msra.mxu0 0.0
    %53 = vmatpush.msra.mxu0 0.0
    %54 = vmatpush.msra.mxu0 0.0
    %55 = vmatpush.msra.mxu0 0.0
    %56 = vmatpush.msra.mxu0 0.0
    %57 = vmatpush.msra.mxu0 0.0
    %58 = vmatpush.msra.mxu0 0.0
    %59 = vmatpush.msra.mxu0 0.0
    %60 = vmatpush.msra.mxu0 0.0
    %61 = vmatpush.msra.mxu0 0.0
    %62 = vmatpush.msra.mxu0 0.0
    %63 = vmatpush.msra.mxu0 0.0
    %64 = vmatpush.msra.mxu0 %v44
    %65 = vmatpush.msra.mxu0 %v43
    %66 = vmatmul.f32.gmra.mxu0 %v48
    %v67 = vpop.f32.mrf.mxu0
    %v68 = vadd.f32 %v45, %v67
    %69 = vdwg.mxu0
    %v70 = vmax.f32 %v68, 0.0
    %v71 = vld [vmem:[#allocation4 + $0x10] sm:$0xff]
    %v72 = vld [vmem:[#allocation4 + $0x18] sm:$0xff]
    %v73 = vld [vmem:[#allocation4 + $0x20] sm:$0xff]
    %v74 = vld [vmem:[#allocation4 + $0x28] sm:$0xff]
    %v75 = vld [vmem:[#allocation4 + $0x30] sm:$0xff]
    %v76 = vld [vmem:[#allocation4 + $0x38] sm:$0xff]
    %v77 = vld [vmem:[#allocation4 + $0x40] sm:$0xff]
    %v78 = vld [vmem:[#allocation4 + $0x48] sm:$0xff]
    %v79 = vld [vmem:[#allocation4 + $0x50] sm:$0xff]
    %v80 = vld [vmem:[#allocation4 + $0x58] sm:$0xff]
    %v81 = vld [vmem:[#allocation4 + $0x60] sm:$0xff]
    %v82 = vld [vmem:[#allocation4 + $0x68] sm:$0xff]
    %v83 = vld [vmem:[#allocation4 + $0x70] sm:$0xff]
    %v84 = vld [vmem:[#allocation4 + $0x78] sm:$0xff]
    %v85 = vld [vmem:[#allocation4 + $0x80] sm:$0xff]
    %v86 = vld [vmem:[#allocation4 + $0x88] sm:$0xff]
    %v87 = vperm.slane %v42, 1
    %88 = vmatpush.msra.mxu0 %v86
    %89 = vmatpush.msra.mxu0 %v85
    %90 = vmatpush.msra.mxu0 %v84
    %91 = vmatpush.msra.mxu0 %v83
    %92 = vmatpush.msra.mxu0 %v82
    %93 = vmatpush.msra.mxu0 %v81
    %94 = vmatpush.msra.mxu0 %v80
    %95 = vmatpush.msra.mxu0 %v79
    %96 = vmatpush.msra.mxu0 %v78
    %97 = vmatpush.msra.mxu0 %v77
    %98 = vmatpush.msra.mxu0 %v76
    %99 = vmatpush.msra.mxu0 %v75
    %100 = vmatpush.msra.mxu0 %v74
    %101 = vmatpush.msra.mxu0 %v73
    %102 = vmatpush.msra.mxu0 %v72
    %103 = vmatpush.msra.mxu0 %v71
    %104 = vmatmul.f32.gmra.mxu0 %v70
    %v105 = vpop.f32.mrf.mxu0
    %v106 = vadd.f32 %v87, %v105
    %107 = vdwg.mxu0
    %v108 = vmax.f32 %v106, 0.0
    %v109 = vld [vmem:[#allocation4 + $0x90] sm:$0xff]
    %v110 = vld [vmem:[#allocation4 + $0x98] sm:$0xff]
    %v111 = vld [vmem:[#allocation4 + $0xa0] sm:$0xff]
    %v112 = vld [vmem:[#allocation4 + $0xa8] sm:$0xff]
    %v113 = vld [vmem:[#allocation4 + $0xb0] sm:$0xff]
    %v114 = vld [vmem:[#allocation4 + $0xb8] sm:$0xff]
    %v115 = vld [vmem:[#allocation4 + $0xc0] sm:$0xff]
    %v116 = vld [vmem:[#allocation4 + $0xc8] sm:$0xff]
    %v117 = vld [vmem:[#allocation4 + $0xd0] sm:$0xff]
    %v118 = vld [vmem:[#allocation4 + $0xd8] sm:$0xff]
    %v119 = vld [vmem:[#allocation4 + $0xe0] sm:$0xff]
    %v120 = vld [vmem:[#allocation4 + $0xe8] sm:$0xff]
    %v121 = vld [vmem:[#allocation4 + $0xf0] sm:$0xff]
    %v122 = vld [vmem:[#allocation4 + $0xf8] sm:$0xff]
    %v123 = vld [vmem:[#allocation4 + $0x100] sm:$0xff]
    %v124 = vld [vmem:[#allocation4 + $0x108] sm:$0xff]
    %v125 = vperm.slane %v42, 2
    %126 = vmatpush.msra.mxu0 %v124
    %127 = vmatpush.msra.mxu0 %v123
    %128 = vmatpush.msra.mxu0 %v122
    %129 = vmatpush.msra.mxu0 %v121
    %130 = vmatpush.msra.mxu0 %v120
    %131 = vmatpush.msra.mxu0 %v119
    %132 = vmatpush.msra.mxu0 %v118
    %133 = vmatpush.msra.mxu0 %v117
    %134 = vmatpush.msra.mxu0 %v116
    %135 = vmatpush.msra.mxu0 %v115
    %136 = vmatpush.msra.mxu0 %v114
    %137 = vmatpush.msra.mxu0 %v113
    %138 = vmatpush.msra.mxu0 %v112
    %139 = vmatpush.msra.mxu0 %v111
    %140 = vmatpush.msra.mxu0 %v110
    %141 = vmatpush.msra.mxu0 %v109
    %142 = vmatmul.f32.gmra.mxu0 %v108
    %v143 = vpop.f32.mrf.mxu0
    %v144 = vadd.f32 %v125, %v143
    %145 = vdwg.mxu0
    %v146 = vld [vmem:[#allocation4 + $0x110] sm:$0xff]
    %v147 = vld [vmem:[#allocation4 + $0x118] sm:$0xff]
    %v148 = vld [vmem:[#allocation4 + $0x120] sm:$0xff]
    %v149 = vld [vmem:[#allocation4 + $0x128] sm:$0xff]
    %v150 = vld [vmem:[#allocation4 + $0x130] sm:$0xff]
    %v151 = vld [vmem:[#allocation4 + $0x138] sm:$0xff]
    %v152 = vld [vmem:[#allocation4 + $0x140] sm:$0xff]
    %v153 = vld [vmem:[#allocation4 + $0x148] sm:$0xff]
    %v154 = vld [vmem:[#allocation4 + $0x150] sm:$0xff]
    %v155 = vld [vmem:[#allocation4 + $0x158] sm:$0xff]
    %v156 = vld [vmem:[#allocation4 + $0x160] sm:$0xff]
    %v157 = vld [vmem:[#allocation4 + $0x168] sm:$0xff]
    %v158 = vld [vmem:[#allocation4 + $0x170] sm:$0xff]
    %v159 = vld [vmem:[#allocation4 + $0x178] sm:$0xff]
    %v160 = vld [vmem:[#allocation4 + $0x180] sm:$0xff]
    %v161 = vld [vmem:[#allocation4 + $0x188] sm:$0xff]
    %v162 = vperm.slane %v42, 3
    %163 = vmatpush.msra.mxu0 %v161
    %164 = vmatpush.msra.mxu0 %v160
    %165 = vmatpush.msra.mxu0 %v159
    %166 = vmatpush.msra.mxu0 %v158
    %167 = vmatpush.msra.mxu0 %v157
    %168 = vmatpush.msra.mxu0 %v156
    %169 = vmatpush.msra.mxu0 %v155
    %170 = vmatpush.msra.mxu0 %v154
    %171 = vmatpush.msra.mxu0 %v153
    %172 = vmatpush.msra.mxu0 %v152
    %173 = vmatpush.msra.mxu0 %v151
    %174 = vmatpush.msra.mxu0 %v150
    %175 = vmatpush.msra.mxu0 %v149
    %176 = vmatpush.msra.mxu0 %v148
    %177 = vmatpush.msra.mxu0 %v147
    %178 = vmatpush.msra.mxu0 %v146
    %179 = vmatmul.f32.gmra.mxu0 %v144
    %v180 = vpop.f32.mrf.mxu0
    %v181 = vadd.f32 %v162, %v180
    %182 = vdwg.mxu0
    %v183 = vmax.f32 %v181, 0.0
    %v184 = vld [vmem:[#allocation4 + $0x190] sm:$0xff]
    %v185 = vld [vmem:[#allocation4 + $0x198] sm:$0xff]
    %v186 = vld [vmem:[#allocation4 + $0x1a0] sm:$0xff]
    %v187 = vld [vmem:[#allocation4 + $0x1a8] sm:$0xff]
    %v188 = vld [vmem:[#allocation4 + $0x1b0] sm:$0xff]
    %v189 = vld [vmem:[#allocation4 + $0x1b8] sm:$0xff]
    %v190 = vld [vmem:[#allocation4 + $0x1c0] sm:$0xff]
    %v191 = vld [vmem:[#allocation4 + $0x1c8] sm:$0xff]
    %v192 = vld [vmem:[#allocation4 + $0x1d0] sm:$0xff]
    %v193 = vld [vmem:[#allocation4 + $0x1d8] sm:$0xff]
    %v194 = vld [vmem:[#allocation4 + $0x1e0] sm:$0xff]
    %v195 = vld [vmem:[#allocation4 + $0x1e8] sm:$0xff]
    %v196 = vld [vmem:[#allocation4 + $0x1f0] sm:$0xff]
    %v197 = vld [vmem:[#allocation4 + $0x1f8] sm:$0xff]
    %v198 = vld [vmem:[#allocation4 + $0x200] sm:$0xff]
    %v199 = vld [vmem:[#allocation4 + $0x208] sm:$0xff]
    %v200 = vperm.slane %v42, 4
    %201 = vmatpush.msra.mxu0 %v199
    %202 = vmatpush.msra.mxu0 %v198
    %203 = vmatpush.msra.mxu0 %v197
    %204 = vmatpush.msra.mxu0 %v196
    %205 = vmatpush.msra.mxu0 %v195
    %206 = vmatpush.msra.mxu0 %v194
    %207 = vmatpush.msra.mxu0 %v193
    %208 = vmatpush.msra.mxu0 %v192
    %209 = vmatpush.msra.mxu0 %v191
    %210 = vmatpush.msra.mxu0 %v190
    %211 = vmatpush.msra.mxu0 %v189
    %212 = vmatpush.msra.mxu0 %v188
    %213 = vmatpush.msra.mxu0 %v187
    %214 = vmatpush.msra.mxu0 %v186
    %215 = vmatpush.msra.mxu0 %v185
    %216 = vmatpush.msra.mxu0 %v184
    %217 = vmatmul.f32.gmra.mxu0 %v183
    %v218 = vpop.f32.mrf.mxu0
    %v219 = vadd.f32 %v200, %v218
    %220 = vdwg.mxu0
    %v221 = vadd.f32 %v219, %v144
    %222 = vst [vmem:[%s2] sm:$0xff] %v221
    // Predicated region
    $region18: #{encoders_forward.1} parent=1 // pred_check
      _
    $region19: #{encoders_forward.1} parent=1 // pred_check_branch
      %224 = sbr.rel (0) target = $region21
    $region20: #{encoders_forward.1} parent=1 // pred_region
      _
    $region21: #{encoders_forward.1} parent=1 // pred_fallthru
      _
    // Predicated region
    $region22: #{encoders_forward.1} parent=1 // pred_check
      _
    $region23: #{encoders_forward.1} parent=1 // pred_check_branch
      %226 = sbr.rel (0) target = $region25
    $region24: #{encoders_forward.1} parent=1 // pred_region
      _
    $region25: #{encoders_forward.1} parent=1 // pred_fallthru
      _
    %227 = vsyncpa [#allocation3], 1
    %228 = vsyncpa [#allocation5], 1

</llo_original>
